<compile_context>
chip_gen: v6e
topology: v6e:2x2x1
jax: 0.10.0
libtpu: 0.0.40
codegen_flags: <defaults>
</compile_context>

<pallas_src>
import math
import numpy as np
import jax
import jax.numpy as jnp
from jax.experimental import pallas as pl
from jax.experimental.pallas import tpu as pltpu


# ---------------------------------------------------------------------------
# Parameters: standard JPEG luminance quantization table (DiffJPEG stores .T)
# ---------------------------------------------------------------------------
_Y_TABLE = np.array(
    [[16, 11, 10, 16, 24, 40, 51, 61],
     [12, 12, 14, 19, 26, 58, 60, 55],
     [14, 13, 16, 24, 40, 57, 69, 56],
     [14, 17, 22, 29, 51, 87, 80, 62],
     [18, 22, 37, 56, 68, 109, 103, 77],
     [24, 35, 55, 64, 81, 104, 113, 92],
     [49, 64, 78, 87, 103, 121, 120, 101],
     [72, 92, 95, 98, 112, 100, 103, 99]], dtype=np.float32).T


def make_y_table():
    return jnp.asarray(_Y_TABLE)


# ---------------------------------------------------------------------------
# Host-side tiling helpers (all static / trace-time Python)
# ---------------------------------------------------------------------------
def _cdiv(a, b):
    return -(-a // b)


def _round_up(x, m):
    return ((x + m - 1) // m) * m


def _divisors(n):
    ds = []
    i = 1
    while i * i <= n:
        if n % i == 0:
            ds.append(i)
            if i != n // i:
                ds.append(n // i)
        i += 1
    return sorted(ds)


def _row_split(B, N):
    """Pick k | N so rows R = B*k fill (8,)-sublane groups as fully as
    possible (fixes B<8 wasting 75% of every vreg/VMEM tile), while keeping
    >= 2 8x8 blocks (>= 128 lanes) per row. Smallest such k wins."""
    best_k, best_score = 1, math.gcd(B, 8)
    for k in _divisors(N):
        if N // k < 2 and N >= 2:
            continue
        score = math.gcd(B * k, 8)
        if score > best_score:
            best_k, best_score = k, score
            if score == 8:
                break
    return best_k


def _choose_tiles(R, C, db, *, target_block_bytes=4 << 20,
                  max_rows=2048, max_lanes=32768):
    """Pick (tb, tm) so one block carries ~target_block_bytes of useful data,
    lane axis widened first (it is the cheap axis), rows sized from the byte
    budget. Blocks that do not divide (R, C) are handled by a cdiv grid."""
    row_q = {4: 8, 2: 16, 1: 32}.get(db, 8)        # sublane quantum per dtype

    tm = C if C <= 128 else min(_round_up(C, 128), max_lanes)

    if R <= row_q:
        tb = R                                      # full dim -> legal block
    else:
        tb = max(row_q, (target_block_bytes // (tm * db)) // row_q * row_q)
        tb = min(tb, min(_round_up(R, row_q), max_rows))
        # Keep a few blocks in flight so both v7x TensorCores get work.
        total = R * C * db
        while tb > row_q and _cdiv(R, tb) * _cdiv(C, tm) < 4 and total > (4 << 20):
            tb = max(row_q, ((tb // 2) // row_q) * row_q)
    return tb, tm


# ---------------------------------------------------------------------------
# Pallas kernel: out = x * y_row (per-column) * factor (per-row)
# ---------------------------------------------------------------------------
def _y_dequantize_kernel(x_ref, y_ref, f_ref, o_ref):
    # x: (tb, tm); y: (1, tm) column multiplier; f: (tb, 1) row multiplier.
    o_ref[...] = x_ref[...] * y_ref[...] * f_ref[...]


def y_dequantize(x, y_table, factor, *, target_block_bytes=4 << 20,
                 max_rows=2048, max_lanes=32768, donate_x=False):
    """x: (B, ..., 8, 8) float; factor: python scalar, 0-d or (B,) array."""
    assert x.shape[-2:] == (8, 8), "trailing dims must be 8x8 JPEG blocks"
    orig_shape = x.shape
    B = orig_shape[0]
    N = int(np.prod(orig_shape[1:-2])) if len(orig_shape) > 2 else 1
    M = N * 64

    # Row-split for full sublane occupancy when B is small / not 8-aligned.
    k = _row_split(B, N)
    R, C = B * k, M // k
    x2 = x.reshape(R, C)                     # lane-dense slab

    db = jnp.dtype(x.dtype).itemsize
    tb, tm = _choose_tiles(R, C, db, target_block_bytes=target_block_bytes,
                           max_rows=max_rows, max_lanes=max_lanes)

    # VMEM-resident column multiplier: y_table flattened, tiled to ONE block's
    # width only (tm % 64 == 0, so column c of any block multiplies
    # y_flat[c % 64]); never materialized at (1, M) in HBM.
    y_row = jnp.tile(y_table.reshape(1, 64).astype(x.dtype), (1, tm // 64))

    # Per-row multiplier: per original batch, repeated k times after row split.
    if jnp.ndim(factor) == 0:
        f_col = jnp.full((R, 1), factor, dtype=x.dtype)
    else:
        f_vec = jnp.asarray(factor, dtype=x.dtype).reshape(-1)
        if f_vec.shape[0] != B:
            raise ValueError(
                f"factor length {f_vec.shape[0]} does not match batch {B}")
        f_col = jnp.repeat(f_vec, k).reshape(R, 1)

    grid = (_cdiv(R, tb), _cdiv(C, tm))

    # VMEM budget: 2 bufs each for x and out blocks + tiny y/f + slack.
    vmem_bytes = 4 * tb * tm * db + 4 * tm * db + 4 * tb * db + (2 << 20)
    vmem_limit = int(min(max(vmem_bytes, 32 << 20), 48 << 20))

    out = pl.pallas_call(
        _y_dequantize_kernel,
        out_shape=jax.ShapeDtypeStruct((R, C), x.dtype),
        grid_spec=pltpu.PrefetchScalarGridSpec(
            num_scalar_prefetch=0,
            grid=grid,
            in_specs=[
                pl.BlockSpec((tb, tm), lambda i, j: (i, j)),   # x slab
                pl.BlockSpec((1, tm), lambda i, j: (0, 0)),    # resident y row
                pl.BlockSpec((tb, 1), lambda i, j: (i, 0)),    # factor column
            ],
            out_specs=pl.BlockSpec((tb, tm), lambda i, j: (i, j)),
        ),
        compiler_params=pltpu.CompilerParams(
            dimension_semantics=("parallel", "parallel"),
            vmem_limit_bytes=vmem_limit),
        input_output_aliases=({0: 0} if donate_x else {}),
    )(x2, y_row, f_col)

    return out.reshape(orig_shape)


# ---------------------------------------------------------------------------
# Pure-JAX reference (matches the PyTorch forward exactly)
# ---------------------------------------------------------------------------
def y_dequantize_ref(x, y_table, factor):
    if jnp.ndim(factor) == 0:
        return x * (y_table * factor)
    b = factor.shape[0]
    table = jnp.broadcast_to(y_table, (b, 1, 8, 8)) * jnp.reshape(
        jnp.asarray(factor, x.dtype), (b, 1, 1, 1))
    return x * table


if __name__ == "__main__":
    y_tab = make_y_table()
    key = jax.random.PRNGKey(0)
    kx, kf, kx2 = jax.random.split(key, 3)

    # Small DiffJPEG-like input: batch=2, 4 blocks of 8x8 (a 16x16 Y plane).
    x = jax.random.uniform(kx, (2, 4, 8, 8), dtype=jnp.float32,
                           minval=-20.0, maxval=20.0)
    factor = jax.random.uniform(kf, (2,), dtype=jnp.float32,
                                minval=0.5, maxval=2.0)

    # Per-batch (tensor) factor branch.
    out_t = jax.block_until_ready(y_dequantize(x, y_tab, factor))
    ref_t = y_dequantize_ref(x, y_tab, factor)
    np.testing.assert_allclose(np.asarray(out_t), np.asarray(ref_t),
                               rtol=1e-6, atol=1e-4)

    # Scalar factor branch.
    out_s = jax.block_until_ready(y_dequantize(x, y_tab, 0.75))
    ref_s = y_dequantize_ref(x, y_tab, 0.75)
    np.testing.assert_allclose(np.asarray(out_s), np.asarray(ref_s),
                               rtol=1e-6, atol=1e-4)

    # Awkward shape: odd block count (15x15 blocks -> N=225) exercises the
    # cdiv grid with masked edge blocks and the row-split heuristic.
    x_odd = jax.random.uniform(kx2, (2, 225, 8, 8), dtype=jnp.float32,
                               minval=-20.0, maxval=20.0)
    out_o = jax.block_until_ready(y_dequantize(x_odd, y_tab, factor))
    ref_o = y_dequantize_ref(x_odd, y_tab, factor)
    np.testing.assert_allclose(np.asarray(out_o), np.asarray(ref_o),
                               rtol=1e-6, atol=1e-4)

    assert out_t.shape == x.shape and out_t.dtype == jnp.float32
    print("KERNEL_OK")
</pallas_src>

<mosaic_0001>
module attributes {stable_mosaic.version = 11 : i64} {
  func.func @_y_dequantize_kernel(%arg0: i32, %arg1: i32, %arg2: memref<4x128xf32, #tpu.memory_space<vmem>>, %arg3: memref<1x128xf32, #tpu.memory_space<vmem>>, %arg4: memref<4x1xf32, #tpu.memory_space<vmem>>, %arg5: memref<4x128xf32, #tpu.memory_space<vmem>>) attributes {dimension_semantics = [#tpu.dimension_semantics<parallel>, #tpu.dimension_semantics<parallel>], iteration_bounds = array<i64: 1, 1>, scalar_prefetch = 0 : i64, scratch_operands = 0 : i64, tpu.core_type = #tpu.core_type<tc>, window_params = [{transform_indices = @transform_0, window_bounds = array<i64: 4, 128>}, {pipeline_mode = #tpu.pipeline_mode<synchronous>, transform_indices = @transform_1, window_bounds = array<i64: 1, 128>}, {transform_indices = @transform_2, window_bounds = array<i64: 4, 1>}, {transform_indices = @transform_3, window_bounds = array<i64: 4, 128>}]} {
    %c0 = arith.constant 0 : index
    %c0_0 = arith.constant 0 : index
    %0 = vector.load %arg2[%c0, %c0_0] : memref<4x128xf32, #tpu.memory_space<vmem>>, vector<4x128xf32>
    %c0_1 = arith.constant 0 : index
    %c0_2 = arith.constant 0 : index
    %1 = vector.load %arg3[%c0_1, %c0_2] : memref<1x128xf32, #tpu.memory_space<vmem>>, vector<1x128xf32>
    %2 = vector.broadcast %1 : vector<1x128xf32> to vector<4x128xf32>
    %3 = arith.mulf %0, %2 : vector<4x128xf32>
    %c0_3 = arith.constant 0 : index
    %c0_4 = arith.constant 0 : index
    %4 = vector.load %arg4[%c0_3, %c0_4] : memref<4x1xf32, #tpu.memory_space<vmem>>, vector<4x1xf32>
    %5 = vector.broadcast %4 : vector<4x1xf32> to vector<4x128xf32>
    %6 = arith.mulf %3, %5 : vector<4x128xf32>
    %c0_5 = arith.constant 0 : index
    %c0_6 = arith.constant 0 : index
    %7 = vector.load %arg5[%c0_5, %c0_6] : memref<4x128xf32, #tpu.memory_space<vmem>>, vector<4x128xf32>
    tpu.vector_store %arg5[%c0_5, %c0_6], %6 {strides = array<i32>} : memref<4x128xf32, #tpu.memory_space<vmem>>, vector<4x128xf32>,
    return
  }
  func.func @transform_0(%arg0: i32, %arg1: i32) -> (i32, i32) {
    %c0_i32 = arith.constant 0 : i32
    return %arg0, %arg1 : i32, i32
  }
  func.func @transform_1(%arg0: i32, %arg1: i32) -> (i32, i32) {
    %c0_i32 = arith.constant 0 : i32
    %c0_i32_0 = arith.constant 0 : i32
    %c0_i32_1 = arith.constant 0 : i32
    return %c0_i32, %c0_i32_0 : i32, i32
  }
  func.func @transform_2(%arg0: i32, %arg1: i32) -> (i32, i32) {
    %c0_i32 = arith.constant 0 : i32
    %c0_i32_0 = arith.constant 0 : i32
    return %arg0, %c0_i32 : i32, i32
  }
  func.func @transform_3(%arg0: i32, %arg1: i32) -> (i32, i32) {
    %c0_i32 = arith.constant 0 : i32
    return %arg0, %arg1 : i32, i32
  }
}

</mosaic_0001>

<llo_original>
// kernel: tpu_custom_call.1
$region0: #{tpu_custom_call.1}
  #allocation0 [shape = 'u32[]', space=smem, size = 0x4, offset = 0x4, fixed_abs, tag = 'smem constant byte address 0x4 - core index']
  #allocation1 [shape = 'u32[144,128]{1,0:T(1,128)}', space=vmem, size = 0x12000, scoped, tag = 'internal scratch']
  %s0 = inlined_call_operand.vmem [shape: f32[4,128], index: 0, kind: input, shape index: {}]
  %s1 = inlined_call_operand.vmem [shape: f32[1,128], index: 1, kind: input, shape index: {}]
  %s2 = inlined_call_operand.vmem [shape: f32[4,1], index: 2, kind: input, shape index: {}]
  %s3 = inlined_call_operand.hbm [shape: f32[4,128], index: 3, kind: output, shape index: {}]
  %s4 = sld [smem:[#allocation0]]
  $region22: #{tpu_custom_call.1} parent=0
    _
  %s6 = ssub.s32 1, %s4
  %s7 = scalar_select 0, %s6, %s4
  $region1: #{tpu_custom_call.1} parent=0
    #allocation2 [shape = 'u8[2048]{0}', space=vmem, size = 0x800, scoped, tag = 'output window, operand 0, single buffered']
    #allocation3 [shape = 's32[1]{0}', space=sflag, size = 0x4, scoped, tag = 'scoped memory for tpu_custom_call.1']
    %8 = vsyncpa [#allocation3], 0
    // Predicated region
    $region2: #{tpu_custom_call.1} parent=1 // pred_check
      _
    $region3: #{tpu_custom_call.1} parent=1 // pred_check_branch
      %10 = sbr.rel (0) target = $region5
    $region4: #{tpu_custom_call.1} parent=1 // pred_region
      _
    $region5: #{tpu_custom_call.1} parent=1 // pred_fallthru
      _
    // Predicated region
    $region6: #{tpu_custom_call.1} parent=1 // pred_check
      _
    $region7: #{tpu_custom_call.1} parent=1 // pred_check_branch
      %12 = sbr.rel (0) target = $region9
    $region8: #{tpu_custom_call.1} parent=1 // pred_region
      _
    $region9: #{tpu_custom_call.1} parent=1 // pred_fallthru
      _
    // Predicated region
    $region10: #{tpu_custom_call.1} parent=1 // pred_check
      _
    $region11: #{tpu_custom_call.1} parent=1 // pred_check_branch
      %14 = sbr.rel (0) target = $region13
    $region12: #{tpu_custom_call.1} parent=1 // pred_region
      _
    $region13: #{tpu_custom_call.1} parent=1 // pred_fallthru
      _
    %v15 = vld [vmem:[%s0] sm:$0xf]
    %v16 = vld [vmem:[%s1] sm:$0x1]
    %v18 = vlaneseq
    %v19 = vshrl.u32 %v18, 7
    %v20 = vsub.s32 0, %v19
    %v21 = vrot.slane %v16, %v20
    %v23 = vmul.f32 %v15, %v21
    %v24 = vld [vmem:[%s2] sm:$0xf]
    %26 = vset.pattern.permute.xlu0 0
    %27 = vperm.xlu0 %26, %v24
    %v28 = vpop.permute.xlu0 %27
    %v30 = vmul.f32 %v23, %v28
    %31 = vst [vmem:[#allocation2] sm:$0xf] %v30
    // Predicated region
    $region14: #{tpu_custom_call.1} parent=1 // pred_check
      _
    $region15: #{tpu_custom_call.1} parent=1 // pred_check_branch
      %33 = sbr.rel (0) target = $region17
    $region16: #{tpu_custom_call.1} parent=1 // pred_region
      %s35 = ssub.s32 64, 64
      %36 = vsyncadd [#allocation3], %s35
      %s38 = sshll.u32 [#allocation2], 4
      %s39 = int_to_ptr.vmem [resolvable:$true] %s38
      %41 = dma.vmem_to_hbm [thread:$0]  %s39, 64, %s3, [#allocation3]
    $region17: #{tpu_custom_call.1} parent=1 // pred_fallthru
      _
    // Predicated region
    $region18: #{tpu_custom_call.1} parent=1 // pred_check
      _
    $region19: #{tpu_custom_call.1} parent=1 // pred_check_branch
      %43 = sbr.rel (0) target = $region21
    $region20: #{tpu_custom_call.1} parent=1 // pred_region
      %44 = dma.done [#allocation3], 64
    $region21: #{tpu_custom_call.1} parent=1 // pred_fallthru
      _
    %45 = vsyncpa [#allocation3], 1

</llo_original>
